<compile_context>
chip_gen: v5e
topology: v5e:2x2
jax: 0.10.0
libtpu: 0.0.40
codegen_flags: <defaults>
</compile_context>

<pallas_src>
import functools

import jax
import jax.numpy as jnp
import numpy as np
from jax.experimental import pallas as pl
from jax.experimental.pallas import tpu as pltpu


def _round_up(x, m):
    return ((x + m - 1) // m) * m


def _vmem_capacity_bytes():
    """Per-TensorCore VMEM capacity; conservative fallback if unavailable."""
    try:
        info = pltpu.get_tpu_info()
        for attr in ("vmem_capacity_bytes", "vmem_size_bytes", "vmem_bytes"):
            v = getattr(info, attr, None)
            if v:
                return int(v)
    except Exception:
        pass
    return 64 << 20  # v7x per-TC VMEM — the smallest current generation.


def _triplet_tile_kernel(margin, n_real, tm,
                         emb_mx_ref, sq_row_ref, sq_col_ref,
                         lab_row_ref, lab_col_ref, out_ref):
    i = pl.program_id(0)
    row0 = pl.multiple_of(i * tm, tm)          # tm is a multiple of 128

    # Row tile sliced from the resident MXU-dtype copy (cast hoisted to wrapper).
    a = emb_mx_ref[pl.ds(row0, tm), :]         # [tm, Dp]   mxu_dtype
    b = emb_mx_ref[...]                        # [Np, Dp]   mxu_dtype (resident)
    gram = jax.lax.dot_general(                # [tm, Np],  f32 accumulation
        a, b, (((1,), (1,)), ((), ())),
        preferred_element_type=jnp.float32)

    # Mine on dist2m = sq_row - 2*gram; add sq_col only after the reductions.
    sq_row = sq_row_ref[...]                   # [1, Np] f32
    dist2m = sq_row - 2.0 * gram               # [tm, Np]

    n_pad = sq_row.shape[1]
    sim = lab_row_ref[...] == lab_col_ref[...]                         # [tm, Np]
    col_valid = jax.lax.broadcasted_iota(jnp.int32, (1, n_pad), 1) < n_real

    NEG_BIG = jnp.float32(-3e38)   # never selected by the positive max
    POS_BIG = jnp.float32(3e38)    # never selected by the negative min
    hard_p2m = jnp.max(jnp.where(sim & col_valid, dist2m, NEG_BIG),
                       axis=1, keepdims=True)                          # [tm, 1]
    hard_n2m = jnp.min(jnp.where((~sim) & col_valid, dist2m, POS_BIG),
                       axis=1, keepdims=True)                          # [tm, 1]

    # sqrt only on the reduced vectors (2*tm EUP ops per tile, not tm*N).
    sq_col = sq_col_ref[...]                                           # [tm, 1]
    hard_p = jnp.sqrt(jnp.maximum(sq_col + hard_p2m, 1e-12))
    hard_n = jnp.sqrt(jnp.maximum(sq_col + hard_n2m, 1e-12))

    # Padded rows contribute nothing to loss / precision.
    ridx = row0 + jax.lax.broadcasted_iota(jnp.int32, (tm, 1), 0)
    row_valid = (ridx < n_real).astype(jnp.float32)

    # MarginRankingLoss(margin), y = 1  (per-sample term; mean taken in wrapper).
    per_sample = jnp.maximum(hard_p - hard_n + jnp.float32(margin), 0.0) * row_valid
    correct = jnp.where(hard_n > hard_p, row_valid, jnp.float32(0.0))

    loss_part = jnp.sum(per_sample, axis=0, keepdims=True)             # [1, 1]
    prec_part = jnp.sum(correct, axis=0, keepdims=True)                # [1, 1]

    # Lane-dense partial row: lane 0 = loss sum, lane 1 = correct count.
    lane = jax.lax.broadcasted_iota(jnp.int32, (1, 128), 1)
    row = jnp.where(lane == 0, loss_part,
                    jnp.where(lane == 1, prec_part, jnp.float32(0.0)))
    out_ref[...] = row.reshape(1, 1, 128)


def triplet_loss(emb, label, *, margin=0.3, normalize_feature=False,
                 mxu_dtype=jnp.bfloat16, tile_rows=None):
    """Pallas implementation of TripletLoss.forward.  Returns (loss, prec)."""
    emb = jnp.asarray(emb, jnp.float32)
    n, d = emb.shape
    label = jnp.asarray(label, jnp.int32)

    # F.normalize(emb, p=2, dim=1, eps=1e-12) — done once in the wrapper since
    # the tiled kernel needs the normalized array resident as the RHS anyway.
    if normalize_feature:
        sumsq = jnp.sum(emb * emb, axis=1, keepdims=True)
        emb = emb * jax.lax.rsqrt(jnp.maximum(sumsq, 1e-24))

    vmem_cap = _vmem_capacity_bytes()
    mxu_itemsize = jnp.dtype(mxu_dtype).itemsize
    d_pad = _round_up(max(d, 1), 128)

    def working_set(tm_, n_pad_):
        resident = 2 * (n_pad_ * d_pad * mxu_itemsize + 2 * n_pad_ * 4)
        tiled_in = 2 * (2 * tm_ * 4) + 2 * 128 * 4
        temps = 4 * tm_ * n_pad_ * 4 + tm_ * d_pad * mxu_itemsize
        return resident + tiled_in + temps

    budget = int(vmem_cap * 0.6)
    if tile_rows is not None:
        tm = _round_up(int(tile_rows), 128)
        tm = max(128, min(tm, _round_up(n, 128)))
    else:
        # 512 on 128 MiB parts (v5e/v6e), 256 on 64 MiB parts (v7x).
        tm = 512 if vmem_cap > (72 << 20) else 256
        tm = max(128, min(tm, _round_up(n, 128)))
        while tm > 128 and working_set(tm, _round_up(n, tm)) > budget:
            tm //= 2

    n_pad = _round_up(n, tm)
    grid = n_pad // tm

    # Pad to lane-dense shapes; compute squared norms + bf16 cast once here.
    emb_p = jnp.pad(emb, ((0, n_pad - n), (0, d_pad - d)))
    sq = jnp.sum(emb_p * emb_p, axis=1)                  # [Np] f32
    sq_row = sq.reshape(1, n_pad)
    sq_col = sq.reshape(n_pad, 1)
    emb_mx = emb_p.astype(mxu_dtype)
    lab_p = jnp.pad(label, (0, n_pad - n))
    lab_row = lab_p.reshape(n_pad, 1)
    lab_col = lab_p.reshape(1, n_pad)

    kernel = functools.partial(_triplet_tile_kernel, float(margin), int(n), int(tm))

    flops = 2 * n_pad * n_pad * d_pad + 8 * n_pad * n_pad
    transcendentals = 2 * n_pad
    bytes_accessed = (n_pad * d_pad * mxu_itemsize + 4 * n_pad * 4
                      + grid * 128 * 4)

    ws = working_set(tm, n_pad)
    vmem_limit = None
    if ws > (16 << 20):
        # Never request the full physical VMEM (64 MiB on v7x) — cap at 75%.
        vmem_limit = min(int(ws * 3 // 2), int(vmem_cap * 3 // 4))
    compiler_params = pltpu.CompilerParams(
        dimension_semantics=("parallel",),
        vmem_limit_bytes=vmem_limit)

    parts = pl.pallas_call(
        kernel,
        grid=(grid,),
        out_shape=jax.ShapeDtypeStruct((grid, 1, 128), jnp.float32),
        in_specs=[
            pl.BlockSpec((n_pad, d_pad), lambda i: (0, 0)),   # emb_mx (resident)
            pl.BlockSpec((1, n_pad), lambda i: (0, 0)),       # sq_row (resident)
            pl.BlockSpec((tm, 1), lambda i: (i, 0)),          # sq_col (row tile)
            pl.BlockSpec((tm, 1), lambda i: (i, 0)),          # lab_row (row tile)
            pl.BlockSpec((1, n_pad), lambda i: (0, 0)),       # lab_col (resident)
        ],
        out_specs=pl.BlockSpec((1, 1, 128), lambda i: (i, 0, 0)),
        cost_estimate=pl.CostEstimate(flops=flops,
                                      transcendentals=transcendentals,
                                      bytes_accessed=bytes_accessed),
        compiler_params=compiler_params,
    )(emb_mx, sq_row, sq_col, lab_row, lab_col)

    inv_n = jnp.float32(1.0 / n)
    loss = jnp.sum(parts[:, 0, 0]) * inv_n
    prec = jnp.sum(parts[:, 0, 1]) * inv_n
    return loss, prec


def _reference_triplet(emb, label, margin, normalize_feature=False):
    """Plain-JAX reference mirroring the PyTorch semantics."""
    emb = emb.astype(jnp.float32)
    if normalize_feature:
        norm = jnp.sqrt(jnp.sum(emb * emb, axis=1, keepdims=True))
        emb = emb / jnp.maximum(norm, 1e-12)
    sq = jnp.sum(emb * emb, axis=1, keepdims=True)
    gram = jnp.matmul(emb, emb.T, precision=jax.lax.Precision.HIGHEST)
    dist2 = sq + sq.T - 2.0 * gram
    dist = jnp.sqrt(jnp.maximum(dist2, 1e-12))
    sim = (label[:, None] == label[None, :]).astype(jnp.float32)
    hard_p = jnp.max(dist - 9999999.0 * (1.0 - sim), axis=1)
    hard_n = jnp.min(dist + 9999999.0 * sim, axis=1)
    loss = jnp.mean(jnp.maximum(hard_p - hard_n + margin, 0.0))
    prec = jnp.sum((hard_n > hard_p).astype(jnp.float32)) / emb.shape[0]
    return loss, prec


if __name__ == "__main__":
    key = jax.random.PRNGKey(0)
    margin = 0.3
    k1, k2, k3 = jax.random.split(key, 3)

    # 1) Small shape, exact f32-MXU path — tight tolerance.
    N, D = 8, 32
    emb = jax.random.normal(k1, (N, D), dtype=jnp.float32)
    label = jnp.array([0, 0, 1, 1, 2, 2, 3, 3], dtype=jnp.int32)

    loss, prec = jax.block_until_ready(
        triplet_loss(emb, label, margin=margin, mxu_dtype=jnp.float32))
    ref_loss, ref_prec = _reference_triplet(emb, label, margin)
    np.testing.assert_allclose(np.asarray(loss), np.asarray(ref_loss),
                               rtol=1e-4, atol=1e-4)
    np.testing.assert_allclose(np.asarray(prec), np.asarray(ref_prec),
                               rtol=0, atol=1e-6)

    # 2) normalize_feature path (still f32 MXU) — tight tolerance.
    loss_n, prec_n = jax.block_until_ready(
        triplet_loss(emb, label, margin=margin, normalize_feature=True,
                     mxu_dtype=jnp.float32))
    rln, rpn = _reference_triplet(emb, label, margin, normalize_feature=True)
    np.testing.assert_allclose(np.asarray(loss_n), np.asarray(rln),
                               rtol=1e-4, atol=1e-4)
    np.testing.assert_allclose(np.asarray(prec_n), np.asarray(rpn),
                               rtol=0, atol=1e-6)

    # 3) Default fast path (bf16 MXU operands, f32 accumulation) — looser
    #    tolerance on loss; precision may flip on near-ties only.
    loss_b, prec_b = jax.block_until_ready(triplet_loss(emb, label, margin=margin))
    np.testing.assert_allclose(np.asarray(loss_b), np.asarray(ref_loss),
                               rtol=5e-2, atol=5e-3)
    assert abs(float(prec_b) - float(ref_prec)) <= 0.25 + 1e-6

    # 4) Non-multiple-of-128 shapes with a multi-tile grid (exercises the
    #    padding masks and the "parallel" row-tiled path).
    N2, D2 = 300, 96
    emb2 = jax.random.normal(k2, (N2, D2), dtype=jnp.float32)
    label2 = jax.random.randint(k3, (N2,), 0, 8, dtype=jnp.int32)
    loss2, prec2 = jax.block_until_ready(
        triplet_loss(emb2, label2, margin=margin, mxu_dtype=jnp.float32,
                     tile_rows=128))
    rl2, rp2 = _reference_triplet(emb2, label2, margin)
    np.testing.assert_allclose(np.asarray(loss2), np.asarray(rl2),
                               rtol=1e-3, atol=1e-3)
    assert abs(float(prec2) - float(rp2)) <= 2.0 / N2 + 1e-6

    print("KERNEL_OK")
</pallas_src>

<mosaic_0001>
module attributes {stable_mosaic.version = 11 : i64} {
  func.func @_triplet_tile_kernel(%arg0: i32, %arg1: memref<128x128xf32, #tpu.memory_space<vmem>>, %arg2: memref<1x128xf32, #tpu.memory_space<vmem>>, %arg3: memref<128x1xf32, #tpu.memory_space<vmem>>, %arg4: memref<128x1xi32, #tpu.memory_space<vmem>>, %arg5: memref<1x128xi32, #tpu.memory_space<vmem>>, %arg6: memref<1x1x128xf32, #tpu.memory_space<vmem>>) attributes {dimension_semantics = [#tpu.dimension_semantics<parallel>], iteration_bounds = array<i64: 1>, scalar_prefetch = 0 : i64, scratch_operands = 0 : i64, tpu.core_type = #tpu.core_type<tc>, window_params = [{pipeline_mode = #tpu.pipeline_mode<synchronous>, transform_indices = @transform_0, window_bounds = array<i64: 128, 128>}, {pipeline_mode = #tpu.pipeline_mode<synchronous>, transform_indices = @transform_1, window_bounds = array<i64: 1, 128>}, {transform_indices = @transform_2, window_bounds = array<i64: 128, 1>}, {transform_indices = @transform_3, window_bounds = array<i64: 128, 1>}, {pipeline_mode = #tpu.pipeline_mode<synchronous>, transform_indices = @transform_4, window_bounds = array<i64: 1, 128>}, {transform_indices = @transform_5, window_bounds = array<i64: 1, 1, 128>}]} {
    %c128_i32 = arith.constant 128 : i32
    %0 = arith.muli %arg0, %c128_i32 : i32
    %1 = tpu.assume_multiple %0, 128 : i32
    %2 = arith.index_cast %1 : i32 to index
    %c0 = arith.constant 0 : index
    %3 = vector.load %arg1[%2, %c0] : memref<128x128xf32, #tpu.memory_space<vmem>>, vector<128x128xf32>
    %c0_0 = arith.constant 0 : index
    %c0_1 = arith.constant 0 : index
    %4 = vector.load %arg1[%c0_0, %c0_1] : memref<128x128xf32, #tpu.memory_space<vmem>>, vector<128x128xf32>
    %cst = arith.constant dense<0.000000e+00> : vector<128x128xf32>
    %5 = tpu.matmul %3, %4, %cst {dimension_numbers = #tpu.dot_dimension_numbers<[1], [1], [0], [0], [0, 0, 1, 0], [], []>} : vector<128x128xf32>, vector<128x128xf32>, vector<128x128xf32> -> vector<128x128xf32>
    %c0_2 = arith.constant 0 : index
    %c0_3 = arith.constant 0 : index
    %6 = vector.load %arg2[%c0_2, %c0_3] : memref<1x128xf32, #tpu.memory_space<vmem>>, vector<1x128xf32>
    %cst_4 = arith.constant 2.000000e+00 : f32
    %7 = vector.broadcast %cst_4 : f32 to vector<128x128xf32>
    %8 = arith.mulf %7, %5 : vector<128x128xf32>
    %9 = vector.broadcast %6 : vector<1x128xf32> to vector<128x128xf32>
    %10 = arith.subf %9, %8 : vector<128x128xf32>
    %c0_5 = arith.constant 0 : index
    %c0_6 = arith.constant 0 : index
    %11 = vector.load %arg4[%c0_5, %c0_6] : memref<128x1xi32, #tpu.memory_space<vmem>>, vector<128x1xi32>
    %c0_7 = arith.constant 0 : index
    %c0_8 = arith.constant 0 : index
    %12 = vector.load %arg5[%c0_7, %c0_8] : memref<1x128xi32, #tpu.memory_space<vmem>>, vector<1x128xi32>
    %13 = vector.broadcast %11 : vector<128x1xi32> to vector<128x128xi32>
    %14 = vector.broadcast %12 : vector<1x128xi32> to vector<128x128xi32>
    %15 = arith.cmpi eq, %13, %14 : vector<128x128xi32>
    %16 = tpu.iota {dimensions = array<i32: 1>} : vector<1x128xi32>
    %c8_i32 = arith.constant 8 : i32
    %17 = vector.broadcast %c8_i32 : i32 to vector<1x128xi32>
    %18 = arith.cmpi slt, %16, %17 : vector<1x128xi32>
    %19 = vector.broadcast %18 : vector<1x128xi1> to vector<128x128xi1>
    %20 = arith.andi %15, %19 : vector<128x128xi1>
    %cst_9 = arith.constant -3.000000e+38 : f32
    %21 = vector.broadcast %cst_9 : f32 to vector<128x128xf32>
    %22 = arith.select %20, %10, %21 : vector<128x128xi1>, vector<128x128xf32>
    %cst_10 = arith.constant dense<0xFF800000> : vector<128xf32>
    %23 = vector.multi_reduction <maximumf>, %22, %cst_10 [1] : vector<128x128xf32> to vector<128xf32>
    %24 = vector.shape_cast %23 : vector<128xf32> to vector<128x1xf32>
    %cst_11 = arith.constant dense<true> : vector<128x128xi1>
    %25 = arith.xori %15, %cst_11 : vector<128x128xi1>
    %26 = vector.broadcast %18 : vector<1x128xi1> to vector<128x128xi1>
    %27 = arith.andi %25, %26 : vector<128x128xi1>
    %cst_12 = arith.constant 3.000000e+38 : f32
    %28 = vector.broadcast %cst_12 : f32 to vector<128x128xf32>
    %29 = arith.select %27, %10, %28 : vector<128x128xi1>, vector<128x128xf32>
    %cst_13 = arith.constant dense<0x7F800000> : vector<128xf32>
    %30 = vector.multi_reduction <minimumf>, %29, %cst_13 [1] : vector<128x128xf32> to vector<128xf32>
    %31 = vector.shape_cast %30 : vector<128xf32> to vector<128x1xf32>
    %c0_14 = arith.constant 0 : index
    %c0_15 = arith.constant 0 : index
    %32 = vector.load %arg3[%c0_14, %c0_15] : memref<128x1xf32, #tpu.memory_space<vmem>>, vector<128x1xf32>
    %33 = arith.addf %32, %24 : vector<128x1xf32>
    %cst_16 = arith.constant 9.99999996E-13 : f32
    %34 = vector.broadcast %cst_16 : f32 to vector<128x1xf32>
    %35 = arith.maximumf %33, %34 : vector<128x1xf32>
    %36 = math.sqrt %35 : vector<128x1xf32>
    %37 = arith.addf %32, %31 : vector<128x1xf32>
    %cst_17 = arith.constant 9.99999996E-13 : f32
    %38 = vector.broadcast %cst_17 : f32 to vector<128x1xf32>
    %39 = arith.maximumf %37, %38 : vector<128x1xf32>
    %40 = math.sqrt %39 : vector<128x1xf32>
    %41 = tpu.iota {dimensions = array<i32: 0>} : vector<128x1xi32>
    %42 = vector.broadcast %1 : i32 to vector<128x1xi32>
    %43 = arith.addi %42, %41 : vector<128x1xi32>
    %c8_i32_18 = arith.constant 8 : i32
    %44 = vector.broadcast %c8_i32_18 : i32 to vector<128x1xi32>
    %45 = arith.cmpi slt, %43, %44 : vector<128x1xi32>
    %46 = arith.extui %45 : vector<128x1xi1> to vector<128x1xi32>
    %47 = arith.sitofp %46 : vector<128x1xi32> to vector<128x1xf32>
    %48 = arith.subf %36, %40 : vector<128x1xf32>
    %cst_19 = arith.constant 3.000000e-01 : f32
    %49 = vector.broadcast %cst_19 : f32 to vector<128x1xf32>
    %50 = arith.addf %48, %49 : vector<128x1xf32>
    %cst_20 = arith.constant 0.000000e+00 : f32
    %51 = vector.broadcast %cst_20 : f32 to vector<128x1xf32>
    %52 = arith.maximumf %50, %51 : vector<128x1xf32>
    %53 = arith.mulf %52, %47 : vector<128x1xf32>
    %54 = arith.cmpf ogt, %40, %36 : vector<128x1xf32>
    %cst_21 = arith.constant 0.000000e+00 : f32
    %55 = vector.broadcast %cst_21 : f32 to vector<128x1xf32>
    %56 = arith.select %54, %47, %55 : vector<128x1xi1>, vector<128x1xf32>
    %cst_22 = arith.constant dense<0.000000e+00> : vector<1xf32>
    %57 = vector.multi_reduction <add>, %53, %cst_22 [0] : vector<128x1xf32> to vector<1xf32>
    %58 = vector.shape_cast %57 : vector<1xf32> to vector<1x1xf32>
    %cst_23 = arith.constant dense<0.000000e+00> : vector<1xf32>
    %59 = vector.multi_reduction <add>, %56, %cst_23 [0] : vector<128x1xf32> to vector<1xf32>
    %60 = vector.shape_cast %59 : vector<1xf32> to vector<1x1xf32>
    %61 = tpu.iota {dimensions = array<i32: 1>} : vector<1x128xi32>
    %c0_i32 = arith.constant 0 : i32
    %62 = vector.broadcast %c0_i32 : i32 to vector<1x128xi32>
    %63 = arith.cmpi eq, %61, %62 : vector<1x128xi32>
    %c1_i32 = arith.constant 1 : i32
    %64 = vector.broadcast %c1_i32 : i32 to vector<1x128xi32>
    %65 = arith.cmpi eq, %61, %64 : vector<1x128xi32>
    %cst_24 = arith.constant 0.000000e+00 : f32
    %66 = vector.shape_cast %60 : vector<1x1xf32> to vector<1x1xf32>
    %67 = vector.broadcast %66 : vector<1x1xf32> to vector<1x128xf32>
    %68 = vector.broadcast %cst_24 : f32 to vector<1x128xf32>
    %69 = arith.select %65, %67, %68 : vector<1x128xi1>, vector<1x128xf32>
    %70 = vector.shape_cast %58 : vector<1x1xf32> to vector<1x1xf32>
    %71 = vector.broadcast %70 : vector<1x1xf32> to vector<1x128xf32>
    %72 = arith.select %63, %71, %69 : vector<1x128xi1>, vector<1x128xf32>
    %73 = vector.shape_cast %72 : vector<1x128xf32> to vector<1x1x128xf32>
    %c0_25 = arith.constant 0 : index
    %c0_26 = arith.constant 0 : index
    %c0_27 = arith.constant 0 : index
    %74 = vector.load %arg6[%c0_25, %c0_26, %c0_27] : memref<1x1x128xf32, #tpu.memory_space<vmem>>, vector<1x1x128xf32>
    tpu.vector_store %arg6[%c0_25, %c0_26, %c0_27], %73 {strides = array<i32>} : memref<1x1x128xf32, #tpu.memory_space<vmem>>, vector<1x1x128xf32>,
    return
  }
  func.func @transform_0(%arg0: i32) -> (i32, i32) {
    %c0_i32 = arith.constant 0 : i32
    %c0_i32_0 = arith.constant 0 : i32
    %c0_i32_1 = arith.constant 0 : i32
    return %c0_i32, %c0_i32_0 : i32, i32
  }
  func.func @transform_1(%arg0: i32) -> (i32, i32) {
    %c0_i32 = arith.constant 0 : i32
    %c0_i32_0 = arith.constant 0 : i32
    %c0_i32_1 = arith.constant 0 : i32
    return %c0_i32, %c0_i32_0 : i32, i32
  }
  func.func @transform_2(%arg0: i32) -> (i32, i32) {
    %c0_i32 = arith.constant 0 : i32
    %c0_i32_0 = arith.constant 0 : i32
    return %arg0, %c0_i32 : i32, i32
  }
  func.func @transform_3(%arg0: i32) -> (i32, i32) {
    %c0_i32 = arith.constant 0 : i32
    %c0_i32_0 = arith.constant 0 : i32
    return %arg0, %c0_i32 : i32, i32
  }
  func.func @transform_4(%arg0: i32) -> (i32, i32) {
    %c0_i32 = arith.constant 0 : i32
    %c0_i32_0 = arith.constant 0 : i32
    %c0_i32_1 = arith.constant 0 : i32
    return %c0_i32, %c0_i32_0 : i32, i32
  }
  func.func @transform_5(%arg0: i32) -> (i32, i32, i32) {
    %c0_i32 = arith.constant 0 : i32
    %c0_i32_0 = arith.constant 0 : i32
    %c0_i32_1 = arith.constant 0 : i32
    return %arg0, %c0_i32, %c0_i32_0 : i32, i32, i32
  }
}

</mosaic_0001>

<llo_original>
// kernel: tpu_custom_call.1
$region0: #{tpu_custom_call.1}
  #allocation0 [shape = 'u32[]', space=smem, size = 0x4, offset = 0x4, fixed_abs, tag = 'smem constant byte address 0x4 - core index']
  #allocation1 [shape = 'u32[72,128]{1,0:T(1,128)}', space=vmem, size = 0x9000, scoped, tag = 'internal scratch']
  %s0 = inlined_call_operand.vmem [shape: f32[128,128], index: 0, kind: input, shape index: {}]
  %s1 = inlined_call_operand.vmem [shape: f32[1,128], index: 1, kind: input, shape index: {}]
  %s2 = inlined_call_operand.vmem [shape: f32[128,1], index: 2, kind: input, shape index: {}]
  %s3 = inlined_call_operand.vmem [shape: s32[128,1], index: 3, kind: input, shape index: {}]
  %s4 = inlined_call_operand.vmem [shape: s32[1,128], index: 4, kind: input, shape index: {}]
  %s5 = inlined_call_operand.hbm [shape: f32[1,1,128], index: 5, kind: output, shape index: {}]
  %s6 = sld [smem:[#allocation0]]
  $region30: #{tpu_custom_call.1} parent=0
    _
  %s8 = ssub.s32 1, %s6
  %s9 = scalar_select 0, %s8, %s6
  $region1: #{tpu_custom_call.1} parent=0
    #allocation2 [shape = 'u8[512]{0}', space=vmem, size = 0x400, scoped, tag = 'output window, operand 0, single buffered']
    #allocation3 [shape = 's32[1]{0}', space=sflag, size = 0x4, scoped, tag = 'scoped memory for tpu_custom_call.1']
    %10 = vsyncpa [#allocation3], 0
    // Predicated region
    $region2: #{tpu_custom_call.1} parent=1 // pred_check
      _
    $region3: #{tpu_custom_call.1} parent=1 // pred_check_branch
      %12 = sbr.rel (0) target = $region5
    $region4: #{tpu_custom_call.1} parent=1 // pred_region
      _
    $region5: #{tpu_custom_call.1} parent=1 // pred_fallthru
      _
    // Predicated region
    $region6: #{tpu_custom_call.1} parent=1 // pred_check
      _
    $region7: #{tpu_custom_call.1} parent=1 // pred_check_branch
      %14 = sbr.rel (0) target = $region9
    $region8: #{tpu_custom_call.1} parent=1 // pred_region
      _
    $region9: #{tpu_custom_call.1} parent=1 // pred_fallthru
      _
    // Predicated region
    $region10: #{tpu_custom_call.1} parent=1 // pred_check
      _
    $region11: #{tpu_custom_call.1} parent=1 // pred_check_branch
      %16 = sbr.rel (0) target = $region13
    $region12: #{tpu_custom_call.1} parent=1 // pred_region
      _
    $region13: #{tpu_custom_call.1} parent=1 // pred_fallthru
      _
    // Predicated region
    $region14: #{tpu_custom_call.1} parent=1 // pred_check
      _
    $region15: #{tpu_custom_call.1} parent=1 // pred_check_branch
      %18 = sbr.rel (0) target = $region17
    $region16: #{tpu_custom_call.1} parent=1 // pred_region
      _
    $region17: #{tpu_custom_call.1} parent=1 // pred_fallthru
      _
    // Predicated region
    $region18: #{tpu_custom_call.1} parent=1 // pred_check
      _
    $region19: #{tpu_custom_call.1} parent=1 // pred_check_branch
      %20 = sbr.rel (0) target = $region21
    $region20: #{tpu_custom_call.1} parent=1 // pred_region
      _
    $region21: #{tpu_custom_call.1} parent=1 // pred_fallthru
      _
    %s21 = smul.u32 0, 128
    %s22 = scalar_lea.vmem %s0, %s21
    %v23 = vld [vmem:[%s22] sm:$0xff]
    %v24 = vld [vmem:[%s22 + $0x8] sm:$0xff]
    %v25 = vld [vmem:[%s22 + $0x10] sm:$0xff]
    %v26 = vld [vmem:[%s22 + $0x18] sm:$0xff]
    %v27 = vld [vmem:[%s22 + $0x20] sm:$0xff]
    %v28 = vld [vmem:[%s22 + $0x28] sm:$0xff]
    %v29 = vld [vmem:[%s22 + $0x30] sm:$0xff]
    %v30 = vld [vmem:[%s22 + $0x38] sm:$0xff]
    %v31 = vld [vmem:[%s22 + $0x40] sm:$0xff]
    %v32 = vld [vmem:[%s22 + $0x48] sm:$0xff]
    %v33 = vld [vmem:[%s22 + $0x50] sm:$0xff]
    %v34 = vld [vmem:[%s22 + $0x58] sm:$0xff]
    %v35 = vld [vmem:[%s22 + $0x60] sm:$0xff]
    %v36 = vld [vmem:[%s22 + $0x68] sm:$0xff]
    %v37 = vld [vmem:[%s22 + $0x70] sm:$0xff]
    %v38 = vld [vmem:[%s22 + $0x78] sm:$0xff]
    %v39 = vld [vmem:[%s0] sm:$0xff]
    %v40 = vld [vmem:[%s0 + $0x8] sm:$0xff]
    %v41 = vld [vmem:[%s0 + $0x10] sm:$0xff]
    %v42 = vld [vmem:[%s0 + $0x18] sm:$0xff]
    %v43 = vld [vmem:[%s0 + $0x20] sm:$0xff]
    %v44 = vld [vmem:[%s0 + $0x28] sm:$0xff]
    %v45 = vld [vmem:[%s0 + $0x30] sm:$0xff]
    %v46 = vld [vmem:[%s0 + $0x38] sm:$0xff]
    %v47 = vld [vmem:[%s0 + $0x40] sm:$0xff]
    %v48 = vld [vmem:[%s0 + $0x48] sm:$0xff]
    %v49 = vld [vmem:[%s0 + $0x50] sm:$0xff]
    %v50 = vld [vmem:[%s0 + $0x58] sm:$0xff]
    %v51 = vld [vmem:[%s0 + $0x60] sm:$0xff]
    %v52 = vld [vmem:[%s0 + $0x68] sm:$0xff]
    %v53 = vld [vmem:[%s0 + $0x70] sm:$0xff]
    %v54 = vld [vmem:[%s0 + $0x78] sm:$0xff]
    %55 = vmatpush.xpose.msra.mxu0 %v54
    %56 = vmatpush.xpose.msra.mxu0 %v53
    %57 = vmatpush.xpose.msra.mxu0 %v52
    %58 = vmatpush.xpose.msra.mxu0 %v51
    %59 = vmatpush.xpose.msra.mxu0 %v50
    %60 = vmatpush.xpose.msra.mxu0 %v49
    %61 = vmatpush.xpose.msra.mxu0 %v48
    %62 = vmatpush.xpose.msra.mxu0 %v47
    %63 = vmatpush.xpose.msra.mxu0 %v46
    %64 = vmatpush.xpose.msra.mxu0 %v45
    %65 = vmatpush.xpose.msra.mxu0 %v44
    %66 = vmatpush.xpose.msra.mxu0 %v43
    %67 = vmatpush.xpose.msra.mxu0 %v42
    %68 = vmatpush.xpose.msra.mxu0 %v41
    %69 = vmatpush.xpose.msra.mxu0 %v40
    %70 = vmatpush.xpose.msra.mxu0 %v39
    %71 = vmatmul.f32.gmra.mxu0 %v23
    %v72 = vpop.f32.mrf.mxu0
    %v73 = vadd.f32 0.0, %v72
    %74 = vmatmul.f32.gmra.mxu0 %v24
    %v75 = vpop.f32.mrf.mxu0
    %v76 = vadd.f32 0.0, %v75
    %77 = vmatmul.f32.gmra.mxu0 %v25
    %v78 = vpop.f32.mrf.mxu0
    %v79 = vadd.f32 0.0, %v78
    %80 = vmatmul.f32.gmra.mxu0 %v26
    %v81 = vpop.f32.mrf.mxu0
    %v82 = vadd.f32 0.0, %v81
    %83 = vmatmul.f32.gmra.mxu0 %v27
    %v84 = vpop.f32.mrf.mxu0
    %v85 = vadd.f32 0.0, %v84
    %86 = vmatmul.f32.gmra.mxu0 %v28
    %v87 = vpop.f32.mrf.mxu0
    %v88 = vadd.f32 0.0, %v87
    %89 = vmatmul.f32.gmra.mxu0 %v29
    %v90 = vpop.f32.mrf.mxu0
    %v91 = vadd.f32 0.0, %v90
    %92 = vmatmul.f32.gmra.mxu0 %v30
    %v93 = vpop.f32.mrf.mxu0
    %v94 = vadd.f32 0.0, %v93
    %95 = vmatmul.f32.gmra.mxu0 %v31
    %v96 = vpop.f32.mrf.mxu0
    %v97 = vadd.f32 0.0, %v96
    %98 = vmatmul.f32.gmra.mxu0 %v32
    %v99 = vpop.f32.mrf.mxu0
    %v100 = vadd.f32 0.0, %v99
    %101 = vmatmul.f32.gmra.mxu0 %v33
    %v102 = vpop.f32.mrf.mxu0
    %v103 = vadd.f32 0.0, %v102
    %104 = vmatmul.f32.gmra.mxu0 %v34
    %v105 = vpop.f32.mrf.mxu0
    %v106 = vadd.f32 0.0, %v105
    %107 = vmatmul.f32.gmra.mxu0 %v35
    %v108 = vpop.f32.mrf.mxu0
    %v109 = vadd.f32 0.0, %v108
    %110 = vmatmul.f32.gmra.mxu0 %v36
    %v111 = vpop.f32.mrf.mxu0
    %v112 = vadd.f32 0.0, %v111
    %113 = vmatmul.f32.gmra.mxu0 %v37
    %v114 = vpop.f32.mrf.mxu0
    %v115 = vadd.f32 0.0, %v114
    %116 = vmatmul.f32.gmra.mxu0 %v38
    %v117 = vpop.f32.mrf.mxu0
    %v118 = vadd.f32 0.0, %v117
    %119 = vdwg.mxu0
    %v120 = vld [vmem:[%s1] sm:$0x1]
    %v121 = vmul.f32 %v73, 2.0
    %v122 = vmul.f32 %v76, 2.0
    %v123 = vmul.f32 %v79, 2.0
    %v124 = vmul.f32 %v82, 2.0
    %v125 = vmul.f32 %v85, 2.0
    %v126 = vmul.f32 %v88, 2.0
    %v127 = vmul.f32 %v91, 2.0
    %v128 = vmul.f32 %v94, 2.0
    %v129 = vmul.f32 %v97, 2.0
    %v130 = vmul.f32 %v100, 2.0
    %v131 = vmul.f32 %v103, 2.0
    %v132 = vmul.f32 %v106, 2.0
    %v133 = vmul.f32 %v109, 2.0
    %v134 = vmul.f32 %v112, 2.0
    %v135 = vmul.f32 %v115, 2.0
    %v136 = vmul.f32 %v118, 2.0
    %v138 = vperm.slane %v120, 0
    %v140 = vsub.f32 %v138, %v121
    %v141 = vsub.f32 %v138, %v122
    %v142 = vsub.f32 %v138, %v123
    %v143 = vsub.f32 %v138, %v124
    %v144 = vsub.f32 %v138, %v125
    %v145 = vsub.f32 %v138, %v126
    %v146 = vsub.f32 %v138, %v127
    %v147 = vsub.f32 %v138, %v128
    %v148 = vsub.f32 %v138, %v129
    %v149 = vsub.f32 %v138, %v130
    %v150 = vsub.f32 %v138, %v131
    %v151 = vsub.f32 %v138, %v132
    %v152 = vsub.f32 %v138, %v133
    %v153 = vsub.f32 %v138, %v134
    %v154 = vsub.f32 %v138, %v135
    %v155 = vsub.f32 %v138, %v136
    %v156 = vld [vmem:[%s3] sm:$0xff]
    %v157 = vld [vmem:[%s3 + $0x8] sm:$0xff]
    %v158 = vld [vmem:[%s3 + $0x10] sm:$0xff]
    %v159 = vld [vmem:[%s3 + $0x18] sm:$0xff]
    %v160 = vld [vmem:[%s3 + $0x20] sm:$0xff]
    %v161 = vld [vmem:[%s3 + $0x28] sm:$0xff]
    %v162 = vld [vmem:[%s3 + $0x30] sm:$0xff]
    %v163 = vld [vmem:[%s3 + $0x38] sm:$0xff]
    %v164 = vld [vmem:[%s3 + $0x40] sm:$0xff]
    %v165 = vld [vmem:[%s3 + $0x48] sm:$0xff]
    %v166 = vld [vmem:[%s3 + $0x50] sm:$0xff]
    %v167 = vld [vmem:[%s3 + $0x58] sm:$0xff]
    %v168 = vld [vmem:[%s3 + $0x60] sm:$0xff]
    %v169 = vld [vmem:[%s3 + $0x68] sm:$0xff]
    %v170 = vld [vmem:[%s3 + $0x70] sm:$0xff]
    %v171 = vld [vmem:[%s3 + $0x78] sm:$0xff]
    %v172 = vld [vmem:[%s4] sm:$0x1]
    %173 = vset.pattern.permute.xlu0 0
    %174 = vperm.xlu0 %173, %v156
    %v175 = vpop.permute.xlu0 %174
    %176 = vset.pattern.permute.xlu0 0
    %177 = vperm.xlu0 %176, %v157
    %v178 = vpop.permute.xlu0 %177
    %179 = vset.pattern.permute.xlu0 0
    %180 = vperm.xlu0 %179, %v158
    %v181 = vpop.permute.xlu0 %180
    %182 = vset.pattern.permute.xlu0 0
    %183 = vperm.xlu0 %182, %v159
    %v184 = vpop.permute.xlu0 %183
    %185 = vset.pattern.permute.xlu0 0
    %186 = vperm.xlu0 %185, %v160
    %v187 = vpop.permute.xlu0 %186
    %188 = vset.pattern.permute.xlu0 0
    %189 = vperm.xlu0 %188, %v161
    %v190 = vpop.permute.xlu0 %189
    %191 = vset.pattern.permute.xlu0 0
    %192 = vperm.xlu0 %191, %v162
    %v193 = vpop.permute.xlu0 %192
    %194 = vset.pattern.permute.xlu0 0
    %195 = vperm.xlu0 %194, %v163
    %v196 = vpop.permute.xlu0 %195
    %197 = vset.pattern.permute.xlu0 0
    %198 = vperm.xlu0 %197, %v164
    %v199 = vpop.permute.xlu0 %198
    %200 = vset.pattern.permute.xlu0 0
    %201 = vperm.xlu0 %200, %v165
    %v202 = vpop.permute.xlu0 %201
    %203 = vset.pattern.permute.xlu0 0
    %204 = vperm.xlu0 %203, %v166
    %v205 = vpop.permute.xlu0 %204
    %206 = vset.pattern.permute.xlu0 0
    %207 = vperm.xlu0 %206, %v167
    %v208 = vpop.permute.xlu0 %207
    %209 = vset.pattern.permute.xlu0 0
    %210 = vperm.xlu0 %209, %v168
    %v211 = vpop.permute.xlu0 %210
    %212 = vset.pattern.permute.xlu0 0
    %213 = vperm.xlu0 %212, %v169
    %v214 = vpop.permute.xlu0 %213
    %215 = vset.pattern.permute.xlu0 0
    %216 = vperm.xlu0 %215, %v170
    %v217 = vpop.permute.xlu0 %216
    %218 = vset.pattern.permute.xlu0 0
    %219 = vperm.xlu0 %218, %v171
    %v220 = vpop.permute.xlu0 %219
    %v221 = vperm.slane %v172, 0
    %vm222 = vcmp.eq.s32.totalorder %v175, %v221
    %vm223 = vcmp.eq.s32.totalorder %v178, %v221
    %vm224 = vcmp.eq.s32.totalorder %v181, %v221
    %vm225 = vcmp.eq.s32.totalorder %v184, %v221
    %vm226 = vcmp.eq.s32.totalorder %v187, %v221
    %vm227 = vcmp.eq.s32.totalorder %v190, %v221
    %vm228 = vcmp.eq.s32.totalorder %v193, %v221
    %vm229 = vcmp.eq.s32.totalorder %v196, %v221
    %vm230 = vcmp.eq.s32.totalorder %v199, %v221
    %vm231 = vcmp.eq.s32.totalorder %v202, %v221
    %vm232 = vcmp.eq.s32.totalorder %v205, %v221
    %vm233 = vcmp.eq.s32.totalorder %v208, %v221
    %vm234 = vcmp.eq.s32.totalorder %v211, %v221
    %vm235 = vcmp.eq.s32.totalorder %v214, %v221
    %vm236 = vcmp.eq.s32.totalorder %v217, %v221
    %vm237 = vcmp.eq.s32.totalorder %v220, %v221
    %v238 = vlaneseq
    %v239 = vand.u32 %v238, 127
    %vm240 = vcmp.lt.s32.totalorder %v239, 8
    %v241 = vsel %vm240, 1, 0
    %vm242 = vcmp.eq.s32.totalorder %v241, 1
    %vm243 = vmand %vm222, %vm242
    %vm244 = vmand %vm223, %vm242
    %vm245 = vmand %vm224, %vm242
    %vm246 = vmand %vm225, %vm242
    %vm247 = vmand %vm226, %vm242
    %vm248 = vmand %vm227, %vm242
    %vm249 = vmand %vm228, %vm242
    %vm250 = vmand %vm229, %vm242
    %vm251 = vmand %vm230, %vm242
    %vm252 = vmand %vm231, %vm242
    %vm253 = vmand %vm232, %vm242
    %vm254 = vmand %vm233, %vm242
    %vm255 = vmand %vm234, %vm242
    %vm256 = vmand %vm235, %vm242
    %vm257 = vmand %vm236, %vm242
    %vm258 = vmand %vm237, %vm242
    %v259 = vsel %vm243, %v140, -3e+38
    %v260 = vsel %vm244, %v141, -3e+38
    %v261 = vsel %vm245, %v142, -3e+38
    %v262 = vsel %vm246, %v143, -3e+38
    %v263 = vsel %vm247, %v144, -3e+38
    %v264 = vsel %vm248, %v145, -3e+38
    %v265 = vsel %vm249, %v146, -3e+38
    %v266 = vsel %vm250, %v147, -3e+38
    %v267 = vsel %vm251, %v148, -3e+38
    %v268 = vsel %vm252, %v149, -3e+38
    %v269 = vsel %vm253, %v150, -3e+38
    %v270 = vsel %vm254, %v151, -3e+38
    %v271 = vsel %vm255, %v152, -3e+38
    %v272 = vsel %vm256, %v153, -3e+38
    %v273 = vsel %vm257, %v154, -3e+38
    %v274 = vsel %vm258, %v155, -3e+38
    %275 = vmax.xlane.f32.xlu0 %v259
    %v276 = vpop.xlane.xlu0 %275
    %277 = vmax.xlane.f32.xlu0 %v260
    %v278 = vpop.xlane.xlu0 %277
    %279 = vmax.xlane.f32.xlu0 %v261
    %v280 = vpop.xlane.xlu0 %279
    %281 = vmax.xlane.f32.xlu0 %v262
    %v282 = vpop.xlane.xlu0 %281
    %283 = vmax.xlane.f32.xlu0 %v263
    %v284 = vpop.xlane.xlu0 %283
    %285 = vmax.xlane.f32.xlu0 %v264
    %v286 = vpop.xlane.xlu0 %285
    %287 = vmax.xlane.f32.xlu0 %v265
    %v288 = vpop.xlane.xlu0 %287
    %289 = vmax.xlane.f32.xlu0 %v266
    %v290 = vpop.xlane.xlu0 %289
    %291 = vmax.xlane.f32.xlu0 %v267
    %v292 = vpop.xlane.xlu0 %291
    %293 = vmax.xlane.f32.xlu0 %v268
    %v294 = vpop.xlane.xlu0 %293
    %295 = vmax.xlane.f32.xlu0 %v269
    %v296 = vpop.xlane.xlu0 %295
    %297 = vmax.xlane.f32.xlu0 %v270
    %v298 = vpop.xlane.xlu0 %297
    %299 = vmax.xlane.f32.xlu0 %v271
    %v300 = vpop.xlane.xlu0 %299
    %301 = vmax.xlane.f32.xlu0 %v272
    %v302 = vpop.xlane.xlu0 %301
    %303 = vmax.xlane.f32.xlu0 %v273
    %v304 = vpop.xlane.xlu0 %303
    %305 = vmax.xlane.f32.xlu0 %v274
    %v306 = vpop.xlane.xlu0 %305
    %vm307 = vmxor %vm222, 1
    %vm308 = vmxor %vm223, 1
    %vm309 = vmxor %vm224, 1
    %vm310 = vmxor %vm225, 1
    %vm311 = vmxor %vm226, 1
    %vm312 = vmxor %vm227, 1
    %vm313 = vmxor %vm228, 1
    %vm314 = vmxor %vm229, 1
    %vm315 = vmxor %vm230, 1
    %vm316 = vmxor %vm231, 1
    %vm317 = vmxor %vm232, 1
    %vm318 = vmxor %vm233, 1
    %vm319 = vmxor %vm234, 1
    %vm320 = vmxor %vm235, 1
    %vm321 = vmxor %vm236, 1
    %vm322 = vmxor %vm237, 1
    %vm323 = vmand %vm307, %vm242
    %vm324 = vmand %vm308, %vm242
    %vm325 = vmand %vm309, %vm242
    %vm326 = vmand %vm310, %vm242
    %vm327 = vmand %vm311, %vm242
    %vm328 = vmand %vm312, %vm242
    %vm329 = vmand %vm313, %vm242
    %vm330 = vmand %vm314, %vm242
    %vm331 = vmand %vm315, %vm242
    %vm332 = vmand %vm316, %vm242
    %vm333 = vmand %vm317, %vm242
    %vm334 = vmand %vm318, %vm242
    %vm335 = vmand %vm319, %vm242
    %vm336 = vmand %vm320, %vm242
    %vm337 = vmand %vm321, %vm242
    %vm338 = vmand %vm322, %vm242
    %v339 = vsel %vm323, %v140, 3e+38
    %v340 = vsel %vm324, %v141, 3e+38
    %v341 = vsel %vm325, %v142, 3e+38
    %v342 = vsel %vm326, %v143, 3e+38
    %v343 = vsel %vm327, %v144, 3e+38
    %v344 = vsel %vm328, %v145, 3e+38
    %v345 = vsel %vm329, %v146, 3e+38
    %v346 = vsel %vm330, %v147, 3e+38
    %v347 = vsel %vm331, %v148, 3e+38
    %v348 = vsel %vm332, %v149, 3e+38
    %v349 = vsel %vm333, %v150, 3e+38
    %v350 = vsel %vm334, %v151, 3e+38
    %v351 = vsel %vm335, %v152, 3e+38
    %v352 = vsel %vm336, %v153, 3e+38
    %v353 = vsel %vm337, %v154, 3e+38
    %v354 = vsel %vm338, %v155, 3e+38
    %355 = vmin.xlane.f32.xlu0 %v339
    %v356 = vpop.xlane.xlu0 %355
    %357 = vmin.xlane.f32.xlu0 %v340
    %v358 = vpop.xlane.xlu0 %357
    %359 = vmin.xlane.f32.xlu0 %v341
    %v360 = vpop.xlane.xlu0 %359
    %361 = vmin.xlane.f32.xlu0 %v342
    %v362 = vpop.xlane.xlu0 %361
    %363 = vmin.xlane.f32.xlu0 %v343
    %v364 = vpop.xlane.xlu0 %363
    %365 = vmin.xlane.f32.xlu0 %v344
    %v366 = vpop.xlane.xlu0 %365
    %367 = vmin.xlane.f32.xlu0 %v345
    %v368 = vpop.xlane.xlu0 %367
    %369 = vmin.xlane.f32.xlu0 %v346
    %v370 = vpop.xlane.xlu0 %369
    %371 = vmin.xlane.f32.xlu0 %v347
    %v372 = vpop.xlane.xlu0 %371
    %373 = vmin.xlane.f32.xlu0 %v348
    %v374 = vpop.xlane.xlu0 %373
    %375 = vmin.xlane.f32.xlu0 %v349
    %v376 = vpop.xlane.xlu0 %375
    %377 = vmin.xlane.f32.xlu0 %v350
    %v378 = vpop.xlane.xlu0 %377
    %379 = vmin.xlane.f32.xlu0 %v351
    %v380 = vpop.xlane.xlu0 %379
    %381 = vmin.xlane.f32.xlu0 %v352
    %v382 = vpop.xlane.xlu0 %381
    %383 = vmin.xlane.f32.xlu0 %v353
    %v384 = vpop.xlane.xlu0 %383
    %385 = vmin.xlane.f32.xlu0 %v354
    %v386 = vpop.xlane.xlu0 %385
    %v387 = vld [vmem:[%s2] sm:$0xff]
    %v388 = vld [vmem:[%s2 + $0x8] sm:$0xff]
    %v389 = vld [vmem:[%s2 + $0x10] sm:$0xff]
    %v390 = vld [vmem:[%s2 + $0x18] sm:$0xff]
    %v391 = vld [vmem:[%s2 + $0x20] sm:$0xff]
    %v392 = vld [vmem:[%s2 + $0x28] sm:$0xff]
    %v393 = vld [vmem:[%s2 + $0x30] sm:$0xff]
    %v394 = vld [vmem:[%s2 + $0x38] sm:$0xff]
    %v395 = vld [vmem:[%s2 + $0x40] sm:$0xff]
    %v396 = vld [vmem:[%s2 + $0x48] sm:$0xff]
    %v397 = vld [vmem:[%s2 + $0x50] sm:$0xff]
    %v398 = vld [vmem:[%s2 + $0x58] sm:$0xff]
    %v399 = vld [vmem:[%s2 + $0x60] sm:$0xff]
    %v400 = vld [vmem:[%s2 + $0x68] sm:$0xff]
    %v401 = vld [vmem:[%s2 + $0x70] sm:$0xff]
    %v402 = vld [vmem:[%s2 + $0x78] sm:$0xff]
    %v403 = vadd.f32 %v387, %v276
    %v404 = vadd.f32 %v388, %v278
    %v405 = vadd.f32 %v389, %v280
    %v406 = vadd.f32 %v390, %v282
    %v407 = vadd.f32 %v391, %v284
    %v408 = vadd.f32 %v392, %v286
    %v409 = vadd.f32 %v393, %v288
    %v410 = vadd.f32 %v394, %v290
    %v411 = vadd.f32 %v395, %v292
    %v412 = vadd.f32 %v396, %v294
    %v413 = vadd.f32 %v397, %v296
    %v414 = vadd.f32 %v398, %v298
    %v415 = vadd.f32 %v399, %v300
    %v416 = vadd.f32 %v400, %v302
    %v417 = vadd.f32 %v401, %v304
    %v418 = vadd.f32 %v402, %v306
    %v419 = vmax.f32 %v403, 1e-12
    %v420 = vmax.f32 %v404, 1e-12
    %v421 = vmax.f32 %v405, 1e-12
    %v422 = vmax.f32 %v406, 1e-12
    %v423 = vmax.f32 %v407, 1e-12
    %v424 = vmax.f32 %v408, 1e-12
    %v425 = vmax.f32 %v409, 1e-12
    %v426 = vmax.f32 %v410, 1e-12
    %v427 = vmax.f32 %v411, 1e-12
    %v428 = vmax.f32 %v412, 1e-12
    %v429 = vmax.f32 %v413, 1e-12
    %v430 = vmax.f32 %v414, 1e-12
    %v431 = vmax.f32 %v415, 1e-12
    %v432 = vmax.f32 %v416, 1e-12
    %v433 = vmax.f32 %v417, 1e-12
    %v434 = vmax.f32 %v418, 1e-12
    %v435 = vrsqrt.pop %v419
    %v436 = vmul.f32 %v435, %v419
    %v437 = vmul.f32 %v436, %v435
    %v438 = vmul.f32 0.5, %v437
    %v439 = vsub.f32 1.5, %v438
    %v440 = vmul.f32 %v435, %v439
    %v441 = vmul.f32 %v419, %v440
    %vm442 = vcmp.eq.f32.partialorder %v419, inf
    %v443 = vsel %vm442, %v419, %v441
    %vm444 = vcmp.eq.f32.partialorder %v419, 0.0
    %v445 = vand.u32 %v419, 2147483648
    %v446 = vsel %vm444, %v445, %v443
    %v447 = vrsqrt.pop %v420
    %v448 = vmul.f32 %v447, %v420
    %v449 = vmul.f32 %v448, %v447
    %v450 = vmul.f32 0.5, %v449
    %v451 = vsub.f32 1.5, %v450
    %v452 = vmul.f32 %v447, %v451
    %v453 = vmul.f32 %v420, %v452
    %vm454 = vcmp.eq.f32.partialorder %v420, inf
    %v455 = vsel %vm454, %v420, %v453
    %vm456 = vcmp.eq.f32.partialorder %v420, 0.0
    %v457 = vand.u32 %v420, 2147483648
    %v458 = vsel %vm456, %v457, %v455
    %v459 = vrsqrt.pop %v421
    %v460 = vmul.f32 %v459, %v421
    %v461 = vmul.f32 %v460, %v459
    %v462 = vmul.f32 0.5, %v461
    %v463 = vsub.f32 1.5, %v462
    %v464 = vmul.f32 %v459, %v463
    %v465 = vmul.f32 %v421, %v464
    %vm466 = vcmp.eq.f32.partialorder %v421, inf
    %v467 = vsel %vm466, %v421, %v465
    %vm468 = vcmp.eq.f32.partialorder %v421, 0.0
    %v469 = vand.u32 %v421, 2147483648
    %v470 = vsel %vm468, %v469, %v467
    %v471 = vrsqrt.pop %v422
    %v472 = vmul.f32 %v471, %v422
    %v473 = vmul.f32 %v472, %v471
    %v474 = vmul.f32 0.5, %v473
    %v475 = vsub.f32 1.5, %v474
    %v476 = vmul.f32 %v471, %v475
    %v477 = vmul.f32 %v422, %v476
    %vm478 = vcmp.eq.f32.partialorder %v422, inf
    %v479 = vsel %vm478, %v422, %v477
    %vm480 = vcmp.eq.f32.partialorder %v422, 0.0
    %v481 = vand.u32 %v422, 2147483648
    %v482 = vsel %vm480, %v481, %v479
    %v483 = vrsqrt.pop %v423
    %v484 = vmul.f32 %v483, %v423
    %v485 = vmul.f32 %v484, %v483
    %v486 = vmul.f32 0.5, %v485
    %v487 = vsub.f32 1.5, %v486
    %v488 = vmul.f32 %v483, %v487
    %v489 = vmul.f32 %v423, %v488
    %vm490 = vcmp.eq.f32.partialorder %v423, inf
    %v491 = vsel %vm490, %v423, %v489
    %vm492 = vcmp.eq.f32.partialorder %v423, 0.0
    %v493 = vand.u32 %v423, 2147483648
    %v494 = vsel %vm492, %v493, %v491
    %v495 = vrsqrt.pop %v424
    %v496 = vmul.f32 %v495, %v424
    %v497 = vmul.f32 %v496, %v495
    %v498 = vmul.f32 0.5, %v497
    %v499 = vsub.f32 1.5, %v498
    %v500 = vmul.f32 %v495, %v499
    %v501 = vmul.f32 %v424, %v500
    %vm502 = vcmp.eq.f32.partialorder %v424, inf
    %v503 = vsel %vm502, %v424, %v501
    %vm504 = vcmp.eq.f32.partialorder %v424, 0.0
    %v505 = vand.u32 %v424, 2147483648
    %v506 = vsel %vm504, %v505, %v503
    %v507 = vrsqrt.pop %v425
    %v508 = vmul.f32 %v507, %v425
    %v509 = vmul.f32 %v508, %v507
    %v510 = vmul.f32 0.5, %v509
    %v511 = vsub.f32 1.5, %v510
    %v512 = vmul.f32 %v507, %v511
    %v513 = vmul.f32 %v425, %v512
    %vm514 = vcmp.eq.f32.partialorder %v425, inf
    %v515 = vsel %vm514, %v425, %v513
    %vm516 = vcmp.eq.f32.partialorder %v425, 0.0
    %v517 = vand.u32 %v425, 2147483648
    %v518 = vsel %vm516, %v517, %v515
    %v519 = vrsqrt.pop %v426
    %v520 = vmul.f32 %v519, %v426
    %v521 = vmul.f32 %v520, %v519
    %v522 = vmul.f32 0.5, %v521
    %v523 = vsub.f32 1.5, %v522
    %v524 = vmul.f32 %v519, %v523
    %v525 = vmul.f32 %v426, %v524
    %vm526 = vcmp.eq.f32.partialorder %v426, inf
    %v527 = vsel %vm526, %v426, %v525
    %vm528 = vcmp.eq.f32.partialorder %v426, 0.0
    %v529 = vand.u32 %v426, 2147483648
    %v530 = vsel %vm528, %v529, %v527
    %v531 = vrsqrt.pop %v427
    %v532 = vmul.f32 %v531, %v427
    %v533 = vmul.f32 %v532, %v531
    %v534 = vmul.f32 0.5, %v533
    %v535 = vsub.f32 1.5, %v534
    %v536 = vmul.f32 %v531, %v535
    %v537 = vmul.f32 %v427, %v536
    %vm538 = vcmp.eq.f32.partialorder %v427, inf
    %v539 = vsel %vm538, %v427, %v537
    %vm540 = vcmp.eq.f32.partialorder %v427, 0.0
    %v541 = vand.u32 %v427, 2147483648
    %v542 = vsel %vm540, %v541, %v539
    %v543 = vrsqrt.pop %v428
    %v544 = vmul.f32 %v543, %v428
    %v545 = vmul.f32 %v544, %v543
    %v546 = vmul.f32 0.5, %v545
    %v547 = vsub.f32 1.5, %v546
    %v548 = vmul.f32 %v543, %v547
    %v549 = vmul.f32 %v428, %v548
    %vm550 = vcmp.eq.f32.partialorder %v428, inf
    %v551 = vsel %vm550, %v428, %v549
    %vm552 = vcmp.eq.f32.partialorder %v428, 0.0
    %v553 = vand.u32 %v428, 2147483648
    %v554 = vsel %vm552, %v553, %v551
    %v555 = vrsqrt.pop %v429
    %v556 = vmul.f32 %v555, %v429
    %v557 = vmul.f32 %v556, %v555
    %v558 = vmul.f32 0.5, %v557
    %v559 = vsub.f32 1.5, %v558
    %v560 = vmul.f32 %v555, %v559
    %v561 = vmul.f32 %v429, %v560
    %vm562 = vcmp.eq.f32.partialorder %v429, inf
    %v563 = vsel %vm562, %v429, %v561
    %vm564 = vcmp.eq.f32.partialorder %v429, 0.0
    %v565 = vand.u32 %v429, 2147483648
    %v566 = vsel %vm564, %v565, %v563
    %v567 = vrsqrt.pop %v430
    %v568 = vmul.f32 %v567, %v430
    %v569 = vmul.f32 %v568, %v567
    %v570 = vmul.f32 0.5, %v569
    %v571 = vsub.f32 1.5, %v570
    %v572 = vmul.f32 %v567, %v571
    %v573 = vmul.f32 %v430, %v572
    %vm574 = vcmp.eq.f32.partialorder %v430, inf
    %v575 = vsel %vm574, %v430, %v573
    %vm576 = vcmp.eq.f32.partialorder %v430, 0.0
    %v577 = vand.u32 %v430, 2147483648
    %v578 = vsel %vm576, %v577, %v575
    %v579 = vrsqrt.pop %v431
    %v580 = vmul.f32 %v579, %v431
    %v581 = vmul.f32 %v580, %v579
    %v582 = vmul.f32 0.5, %v581
    %v583 = vsub.f32 1.5, %v582
    %v584 = vmul.f32 %v579, %v583
    %v585 = vmul.f32 %v431, %v584
    %vm586 = vcmp.eq.f32.partialorder %v431, inf
    %v587 = vsel %vm586, %v431, %v585
    %vm588 = vcmp.eq.f32.partialorder %v431, 0.0
    %v589 = vand.u32 %v431, 2147483648
    %v590 = vsel %vm588, %v589, %v587
    %v591 = vrsqrt.pop %v432
    %v592 = vmul.f32 %v591, %v432
    %v593 = vmul.f32 %v592, %v591
    %v594 = vmul.f32 0.5, %v593
    %v595 = vsub.f32 1.5, %v594
    %v596 = vmul.f32 %v591, %v595
    %v597 = vmul.f32 %v432, %v596
    %vm598 = vcmp.eq.f32.partialorder %v432, inf
    %v599 = vsel %vm598, %v432, %v597
    %vm600 = vcmp.eq.f32.partialorder %v432, 0.0
    %v601 = vand.u32 %v432, 2147483648
    %v602 = vsel %vm600, %v601, %v599
    %v603 = vrsqrt.pop %v433
    %v604 = vmul.f32 %v603, %v433
    %v605 = vmul.f32 %v604, %v603
    %v606 = vmul.f32 0.5, %v605
    %v607 = vsub.f32 1.5, %v606
    %v608 = vmul.f32 %v603, %v607
    %v609 = vmul.f32 %v433, %v608
    %vm610 = vcmp.eq.f32.partialorder %v433, inf
    %v611 = vsel %vm610, %v433, %v609
    %vm612 = vcmp.eq.f32.partialorder %v433, 0.0
    %v613 = vand.u32 %v433, 2147483648
    %v614 = vsel %vm612, %v613, %v611
    %v615 = vrsqrt.pop %v434
    %v616 = vmul.f32 %v615, %v434
    %v617 = vmul.f32 %v616, %v615
    %v618 = vmul.f32 0.5, %v617
    %v619 = vsub.f32 1.5, %v618
    %v620 = vmul.f32 %v615, %v619
    %v621 = vmul.f32 %v434, %v620
    %vm622 = vcmp.eq.f32.partialorder %v434, inf
    %v623 = vsel %vm622, %v434, %v621
    %vm624 = vcmp.eq.f32.partialorder %v434, 0.0
    %v625 = vand.u32 %v434, 2147483648
    %v626 = vsel %vm624, %v625, %v623
    %v627 = vadd.f32 %v387, %v356
    %v628 = vadd.f32 %v388, %v358
    %v629 = vadd.f32 %v389, %v360
    %v630 = vadd.f32 %v390, %v362
    %v631 = vadd.f32 %v391, %v364
    %v632 = vadd.f32 %v392, %v366
    %v633 = vadd.f32 %v393, %v368
    %v634 = vadd.f32 %v394, %v370
    %v635 = vadd.f32 %v395, %v372
    %v636 = vadd.f32 %v396, %v374
    %v637 = vadd.f32 %v397, %v376
    %v638 = vadd.f32 %v398, %v378
    %v639 = vadd.f32 %v399, %v380
    %v640 = vadd.f32 %v400, %v382
    %v641 = vadd.f32 %v401, %v384
    %v642 = vadd.f32 %v402, %v386
    %v643 = vmax.f32 %v627, 1e-12
    %v644 = vmax.f32 %v628, 1e-12
    %v645 = vmax.f32 %v629, 1e-12
    %v646 = vmax.f32 %v630, 1e-12
    %v647 = vmax.f32 %v631, 1e-12
    %v648 = vmax.f32 %v632, 1e-12
    %v649 = vmax.f32 %v633, 1e-12
    %v650 = vmax.f32 %v634, 1e-12
    %v651 = vmax.f32 %v635, 1e-12
    %v652 = vmax.f32 %v636, 1e-12
    %v653 = vmax.f32 %v637, 1e-12
    %v654 = vmax.f32 %v638, 1e-12
    %v655 = vmax.f32 %v639, 1e-12
    %v656 = vmax.f32 %v640, 1e-12
    %v657 = vmax.f32 %v641, 1e-12
    %v658 = vmax.f32 %v642, 1e-12
    %v659 = vrsqrt.pop %v643
    %v660 = vmul.f32 %v659, %v643
    %v661 = vmul.f32 %v660, %v659
    %v662 = vmul.f32 0.5, %v661
    %v663 = vsub.f32 1.5, %v662
    %v664 = vmul.f32 %v659, %v663
    %v665 = vmul.f32 %v643, %v664
    %vm666 = vcmp.eq.f32.partialorder %v643, inf
    %v667 = vsel %vm666, %v643, %v665
    %vm668 = vcmp.eq.f32.partialorder %v643, 0.0
    %v669 = vand.u32 %v643, 2147483648
    %v670 = vsel %vm668, %v669, %v667
    %v671 = vrsqrt.pop %v644
    %v672 = vmul.f32 %v671, %v644
    %v673 = vmul.f32 %v672, %v671
    %v674 = vmul.f32 0.5, %v673
    %v675 = vsub.f32 1.5, %v674
    %v676 = vmul.f32 %v671, %v675
    %v677 = vmul.f32 %v644, %v676
    %vm678 = vcmp.eq.f32.partialorder %v644, inf
    %v679 = vsel %vm678, %v644, %v677
    %vm680 = vcmp.eq.f32.partialorder %v644, 0.0
    %v681 = vand.u32 %v644, 2147483648
    %v682 = vsel %vm680, %v681, %v679
    %v683 = vrsqrt.pop %v645
    %v684 = vmul.f32 %v683, %v645
    %v685 = vmul.f32 %v684, %v683
    %v686 = vmul.f32 0.5, %v685
    %v687 = vsub.f32 1.5, %v686
    %v688 = vmul.f32 %v683, %v687
    %v689 = vmul.f32 %v645, %v688
    %vm690 = vcmp.eq.f32.partialorder %v645, inf
    %v691 = vsel %vm690, %v645, %v689
    %vm692 = vcmp.eq.f32.partialorder %v645, 0.0
    %v693 = vand.u32 %v645, 2147483648
    %v694 = vsel %vm692, %v693, %v691
    %v695 = vrsqrt.pop %v646
    %v696 = vmul.f32 %v695, %v646
    %v697 = vmul.f32 %v696, %v695
    %v698 = vmul.f32 0.5, %v697
    %v699 = vsub.f32 1.5, %v698
    %v700 = vmul.f32 %v695, %v699
    %v701 = vmul.f32 %v646, %v700
    %vm702 = vcmp.eq.f32.partialorder %v646, inf
    %v703 = vsel %vm702, %v646, %v701
    %vm704 = vcmp.eq.f32.partialorder %v646, 0.0
    %v705 = vand.u32 %v646, 2147483648
    %v706 = vsel %vm704, %v705, %v703
    %v707 = vrsqrt.pop %v647
    %v708 = vmul.f32 %v707, %v647
    %v709 = vmul.f32 %v708, %v707
    %v710 = vmul.f32 0.5, %v709
    %v711 = vsub.f32 1.5, %v710
    %v712 = vmul.f32 %v707, %v711
    %v713 = vmul.f32 %v647, %v712
    %vm714 = vcmp.eq.f32.partialorder %v647, inf
    %v715 = vsel %vm714, %v647, %v713
    %vm716 = vcmp.eq.f32.partialorder %v647, 0.0
    %v717 = vand.u32 %v647, 2147483648
    %v718 = vsel %vm716, %v717, %v715
    %v719 = vrsqrt.pop %v648
    %v720 = vmul.f32 %v719, %v648
    %v721 = vmul.f32 %v720, %v719
    %v722 = vmul.f32 0.5, %v721
    %v723 = vsub.f32 1.5, %v722
    %v724 = vmul.f32 %v719, %v723
    %v725 = vmul.f32 %v648, %v724
    %vm726 = vcmp.eq.f32.partialorder %v648, inf
    %v727 = vsel %vm726, %v648, %v725
    %vm728 = vcmp.eq.f32.partialorder %v648, 0.0
    %v729 = vand.u32 %v648, 2147483648
    %v730 = vsel %vm728, %v729, %v727
    %v731 = vrsqrt.pop %v649
    %v732 = vmul.f32 %v731, %v649
    %v733 = vmul.f32 %v732, %v731
    %v734 = vmul.f32 0.5, %v733
    %v735 = vsub.f32 1.5, %v734
    %v736 = vmul.f32 %v731, %v735
    %v737 = vmul.f32 %v649, %v736
    %vm738 = vcmp.eq.f32.partialorder %v649, inf
    %v739 = vsel %vm738, %v649, %v737
    %vm740 = vcmp.eq.f32.partialorder %v649, 0.0
    %v741 = vand.u32 %v649, 2147483648
    %v742 = vsel %vm740, %v741, %v739
    %v743 = vrsqrt.pop %v650
    %v744 = vmul.f32 %v743, %v650
    %v745 = vmul.f32 %v744, %v743
    %v746 = vmul.f32 0.5, %v745
    %v747 = vsub.f32 1.5, %v746
    %v748 = vmul.f32 %v743, %v747
    %v749 = vmul.f32 %v650, %v748
    %vm750 = vcmp.eq.f32.partialorder %v650, inf
    %v751 = vsel %vm750, %v650, %v749
    %vm752 = vcmp.eq.f32.partialorder %v650, 0.0
    %v753 = vand.u32 %v650, 2147483648
    %v754 = vsel %vm752, %v753, %v751
    %v755 = vrsqrt.pop %v651
    %v756 = vmul.f32 %v755, %v651
    %v757 = vmul.f32 %v756, %v755
    %v758 = vmul.f32 0.5, %v757
    %v759 = vsub.f32 1.5, %v758
    %v760 = vmul.f32 %v755, %v759
    %v761 = vmul.f32 %v651, %v760
    %vm762 = vcmp.eq.f32.partialorder %v651, inf
    %v763 = vsel %vm762, %v651, %v761
    %vm764 = vcmp.eq.f32.partialorder %v651, 0.0
    %v765 = vand.u32 %v651, 2147483648
    %v766 = vsel %vm764, %v765, %v763
    %v767 = vrsqrt.pop %v652
    %v768 = vmul.f32 %v767, %v652
    %v769 = vmul.f32 %v768, %v767
    %v770 = vmul.f32 0.5, %v769
    %v771 = vsub.f32 1.5, %v770
    %v772 = vmul.f32 %v767, %v771
    %v773 = vmul.f32 %v652, %v772
    %vm774 = vcmp.eq.f32.partialorder %v652, inf
    %v775 = vsel %vm774, %v652, %v773
    %vm776 = vcmp.eq.f32.partialorder %v652, 0.0
    %v777 = vand.u32 %v652, 2147483648
    %v778 = vsel %vm776, %v777, %v775
    %v779 = vrsqrt.pop %v653
    %v780 = vmul.f32 %v779, %v653
    %v781 = vmul.f32 %v780, %v779
    %v782 = vmul.f32 0.5, %v781
    %v783 = vsub.f32 1.5, %v782
    %v784 = vmul.f32 %v779, %v783
    %v785 = vmul.f32 %v653, %v784
    %vm786 = vcmp.eq.f32.partialorder %v653, inf
    %v787 = vsel %vm786, %v653, %v785
    %vm788 = vcmp.eq.f32.partialorder %v653, 0.0
    %v789 = vand.u32 %v653, 2147483648
    %v790 = vsel %vm788, %v789, %v787
    %v791 = vrsqrt.pop %v654
    %v792 = vmul.f32 %v791, %v654
    %v793 = vmul.f32 %v792, %v791
    %v794 = vmul.f32 0.5, %v793
    %v795 = vsub.f32 1.5, %v794
    %v796 = vmul.f32 %v791, %v795
    %v797 = vmul.f32 %v654, %v796
    %vm798 = vcmp.eq.f32.partialorder %v654, inf
    %v799 = vsel %vm798, %v654, %v797
    %vm800 = vcmp.eq.f32.partialorder %v654, 0.0
    %v801 = vand.u32 %v654, 2147483648
    %v802 = vsel %vm800, %v801, %v799
    %v803 = vrsqrt.pop %v655
    %v804 = vmul.f32 %v803, %v655
    %v805 = vmul.f32 %v804, %v803
    %v806 = vmul.f32 0.5, %v805
    %v807 = vsub.f32 1.5, %v806
    %v808 = vmul.f32 %v803, %v807
    %v809 = vmul.f32 %v655, %v808
    %vm810 = vcmp.eq.f32.partialorder %v655, inf
    %v811 = vsel %vm810, %v655, %v809
    %vm812 = vcmp.eq.f32.partialorder %v655, 0.0
    %v813 = vand.u32 %v655, 2147483648
    %v814 = vsel %vm812, %v813, %v811
    %v815 = vrsqrt.pop %v656
    %v816 = vmul.f32 %v815, %v656
    %v817 = vmul.f32 %v816, %v815
    %v818 = vmul.f32 0.5, %v817
    %v819 = vsub.f32 1.5, %v818
    %v820 = vmul.f32 %v815, %v819
    %v821 = vmul.f32 %v656, %v820
    %vm822 = vcmp.eq.f32.partialorder %v656, inf
    %v823 = vsel %vm822, %v656, %v821
    %vm824 = vcmp.eq.f32.partialorder %v656, 0.0
    %v825 = vand.u32 %v656, 2147483648
    %v826 = vsel %vm824, %v825, %v823
    %v827 = vrsqrt.pop %v657
    %v828 = vmul.f32 %v827, %v657
    %v829 = vmul.f32 %v828, %v827
    %v830 = vmul.f32 0.5, %v829
    %v831 = vsub.f32 1.5, %v830
    %v832 = vmul.f32 %v827, %v831
    %v833 = vmul.f32 %v657, %v832
    %vm834 = vcmp.eq.f32.partialorder %v657, inf
    %v835 = vsel %vm834, %v657, %v833
    %vm836 = vcmp.eq.f32.partialorder %v657, 0.0
    %v837 = vand.u32 %v657, 2147483648
    %v838 = vsel %vm836, %v837, %v835
    %v839 = vrsqrt.pop %v658
    %v840 = vmul.f32 %v839, %v658
    %v841 = vmul.f32 %v840, %v839
    %v842 = vmul.f32 0.5, %v841
    %v843 = vsub.f32 1.5, %v842
    %v844 = vmul.f32 %v839, %v843
    %v845 = vmul.f32 %v658, %v844
    %vm846 = vcmp.eq.f32.partialorder %v658, inf
    %v847 = vsel %vm846, %v658, %v845
    %vm848 = vcmp.eq.f32.partialorder %v658, 0.0
    %v849 = vand.u32 %v658, 2147483648
    %v850 = vsel %vm848, %v849, %v847
    %v851 = vlaneseq
    %v852 = vshrl.u32 %v851, 7
    %v853 = vadd.s32 %v852, 8
    %v854 = vadd.s32 %v852, 16
    %v855 = vadd.s32 %v852, 24
    %v856 = vadd.s32 %v852, 32
    %v857 = vadd.s32 %v852, 40
    %v858 = vadd.s32 %v852, 48
    %v859 = vadd.s32 %v852, 56
    %v860 = vadd.s32 %v852, 64
    %v861 = vadd.s32 %v852, 72
    %v862 = vadd.s32 %v852, 80
    %v863 = vadd.s32 %v852, 88
    %v864 = vadd.s32 %v852, 96
    %v865 = vadd.s32 %v852, 104
    %v866 = vadd.s32 %v852, 112
    %v867 = vadd.s32 %v852, 120
    %v868 = vstv %s21
    %v869 = vadd.s32 %v868, %v852
    %v870 = vadd.s32 %v868, %v853
    %v871 = vadd.s32 %v868, %v854
    %v872 = vadd.s32 %v868, %v855
    %v873 = vadd.s32 %v868, %v856
    %v874 = vadd.s32 %v868, %v857
    %v875 = vadd.s32 %v868, %v858
    %v876 = vadd.s32 %v868, %v859
    %v877 = vadd.s32 %v868, %v860
    %v878 = vadd.s32 %v868, %v861
    %v879 = vadd.s32 %v868, %v862
    %v880 = vadd.s32 %v868, %v863
    %v881 = vadd.s32 %v868, %v864
    %v882 = vadd.s32 %v868, %v865
    %v883 = vadd.s32 %v868, %v866
    %v884 = vadd.s32 %v868, %v867
    %vm885 = vcmp.lt.s32.totalorder %v869, 8
    %vm886 = vcmp.lt.s32.totalorder %v870, 8
    %vm887 = vcmp.lt.s32.totalorder %v871, 8
    %vm888 = vcmp.lt.s32.totalorder %v872, 8
    %vm889 = vcmp.lt.s32.totalorder %v873, 8
    %vm890 = vcmp.lt.s32.totalorder %v874, 8
    %vm891 = vcmp.lt.s32.totalorder %v875, 8
    %vm892 = vcmp.lt.s32.totalorder %v876, 8
    %vm893 = vcmp.lt.s32.totalorder %v877, 8
    %vm894 = vcmp.lt.s32.totalorder %v878, 8
    %vm895 = vcmp.lt.s32.totalorder %v879, 8
    %vm896 = vcmp.lt.s32.totalorder %v880, 8
    %vm897 = vcmp.lt.s32.totalorder %v881, 8
    %vm898 = vcmp.lt.s32.totalorder %v882, 8
    %vm899 = vcmp.lt.s32.totalorder %v883, 8
    %vm900 = vcmp.lt.s32.totalorder %v884, 8
    %v901 = vsel %vm885, 1, 0
    %v902 = vsel %vm886, 1, 0
    %v903 = vsel %vm887, 1, 0
    %v904 = vsel %vm888, 1, 0
    %v905 = vsel %vm889, 1, 0
    %v906 = vsel %vm890, 1, 0
    %v907 = vsel %vm891, 1, 0
    %v908 = vsel %vm892, 1, 0
    %v909 = vsel %vm893, 1, 0
    %v910 = vsel %vm894, 1, 0
    %v911 = vsel %vm895, 1, 0
    %v912 = vsel %vm896, 1, 0
    %v913 = vsel %vm897, 1, 0
    %v914 = vsel %vm898, 1, 0
    %v915 = vsel %vm899, 1, 0
    %v916 = vsel %vm900, 1, 0
    %v917 = vcvt.s32.f32 %v901
    %v918 = vcvt.s32.f32 %v902
    %v919 = vcvt.s32.f32 %v903
    %v920 = vcvt.s32.f32 %v904
    %v921 = vcvt.s32.f32 %v905
    %v922 = vcvt.s32.f32 %v906
    %v923 = vcvt.s32.f32 %v907
    %v924 = vcvt.s32.f32 %v908
    %v925 = vcvt.s32.f32 %v909
    %v926 = vcvt.s32.f32 %v910
    %v927 = vcvt.s32.f32 %v911
    %v928 = vcvt.s32.f32 %v912
    %v929 = vcvt.s32.f32 %v913
    %v930 = vcvt.s32.f32 %v914
    %v931 = vcvt.s32.f32 %v915
    %v932 = vcvt.s32.f32 %v916
    %v933 = vsub.f32 %v446, %v670
    %v934 = vsub.f32 %v458, %v682
    %v935 = vsub.f32 %v470, %v694
    %v936 = vsub.f32 %v482, %v706
    %v937 = vsub.f32 %v494, %v718
    %v938 = vsub.f32 %v506, %v730
    %v939 = vsub.f32 %v518, %v742
    %v940 = vsub.f32 %v530, %v754
    %v941 = vsub.f32 %v542, %v766
    %v942 = vsub.f32 %v554, %v778
    %v943 = vsub.f32 %v566, %v790
    %v944 = vsub.f32 %v578, %v802
    %v945 = vsub.f32 %v590, %v814
    %v946 = vsub.f32 %v602, %v826
    %v947 = vsub.f32 %v614, %v838
    %v948 = vsub.f32 %v626, %v850
    %v949 = vadd.f32 %v933, 0.3
    %v950 = vadd.f32 %v934, 0.3
    %v951 = vadd.f32 %v935, 0.3
    %v952 = vadd.f32 %v936, 0.3
    %v953 = vadd.f32 %v937, 0.3
    %v954 = vadd.f32 %v938, 0.3
    %v955 = vadd.f32 %v939, 0.3
    %v956 = vadd.f32 %v940, 0.3
    %v957 = vadd.f32 %v941, 0.3
    %v958 = vadd.f32 %v942, 0.3
    %v959 = vadd.f32 %v943, 0.3
    %v960 = vadd.f32 %v944, 0.3
    %v961 = vadd.f32 %v945, 0.3
    %v962 = vadd.f32 %v946, 0.3
    %v963 = vadd.f32 %v947, 0.3
    %v964 = vadd.f32 %v948, 0.3
    %v965 = vmax.f32 %v949, 0.0
    %v966 = vmax.f32 %v950, 0.0
    %v967 = vmax.f32 %v951, 0.0
    %v968 = vmax.f32 %v952, 0.0
    %v969 = vmax.f32 %v953, 0.0
    %v970 = vmax.f32 %v954, 0.0
    %v971 = vmax.f32 %v955, 0.0
    %v972 = vmax.f32 %v956, 0.0
    %v973 = vmax.f32 %v957, 0.0
    %v974 = vmax.f32 %v958, 0.0
    %v975 = vmax.f32 %v959, 0.0
    %v976 = vmax.f32 %v960, 0.0
    %v977 = vmax.f32 %v961, 0.0
    %v978 = vmax.f32 %v962, 0.0
    %v979 = vmax.f32 %v963, 0.0
    %v980 = vmax.f32 %v964, 0.0
    %v981 = vmul.f32 %v965, %v917
    %v982 = vmul.f32 %v966, %v918
    %v983 = vmul.f32 %v967, %v919
    %v984 = vmul.f32 %v968, %v920
    %v985 = vmul.f32 %v969, %v921
    %v986 = vmul.f32 %v970, %v922
    %v987 = vmul.f32 %v971, %v923
    %v988 = vmul.f32 %v972, %v924
    %v989 = vmul.f32 %v973, %v925
    %v990 = vmul.f32 %v974, %v926
    %v991 = vmul.f32 %v975, %v927
    %v992 = vmul.f32 %v976, %v928
    %v993 = vmul.f32 %v977, %v929
    %v994 = vmul.f32 %v978, %v930
    %v995 = vmul.f32 %v979, %v931
    %v996 = vmul.f32 %v980, %v932
    %vm997 = vcmp.gt.f32.partialorder %v670, %v446
    %vm998 = vcmp.gt.f32.partialorder %v682, %v458
    %vm999 = vcmp.gt.f32.partialorder %v694, %v470
    %vm1000 = vcmp.gt.f32.partialorder %v706, %v482
    %vm1001 = vcmp.gt.f32.partialorder %v718, %v494
    %vm1002 = vcmp.gt.f32.partialorder %v730, %v506
    %vm1003 = vcmp.gt.f32.partialorder %v742, %v518
    %vm1004 = vcmp.gt.f32.partialorder %v754, %v530
    %vm1005 = vcmp.gt.f32.partialorder %v766, %v542
    %vm1006 = vcmp.gt.f32.partialorder %v778, %v554
    %vm1007 = vcmp.gt.f32.partialorder %v790, %v566
    %vm1008 = vcmp.gt.f32.partialorder %v802, %v578
    %vm1009 = vcmp.gt.f32.partialorder %v814, %v590
    %vm1010 = vcmp.gt.f32.partialorder %v826, %v602
    %vm1011 = vcmp.gt.f32.partialorder %v838, %v614
    %vm1012 = vcmp.gt.f32.partialorder %v850, %v626
    %v1013 = vsel %vm997, %v917, 0.0
    %v1014 = vsel %vm998, %v918, 0.0
    %v1015 = vsel %vm999, %v919, 0.0
    %v1016 = vsel %vm1000, %v920, 0.0
    %v1017 = vsel %vm1001, %v921, 0.0
    %v1018 = vsel %vm1002, %v922, 0.0
    %v1019 = vsel %vm1003, %v923, 0.0
    %v1020 = vsel %vm1004, %v924, 0.0
    %v1021 = vsel %vm1005, %v925, 0.0
    %v1022 = vsel %vm1006, %v926, 0.0
    %v1023 = vsel %vm1007, %v927, 0.0
    %v1024 = vsel %vm1008, %v928, 0.0
    %v1025 = vsel %vm1009, %v929, 0.0
    %v1026 = vsel %vm1010, %v930, 0.0
    %v1027 = vsel %vm1011, %v931, 0.0
    %v1028 = vsel %vm1012, %v932, 0.0
    %vm1029 = vcmask 7168
    %v1030 = vsel %vm1029, %v981, 0.0
    %v1031 = vsel %vm1029, %v982, 0.0
    %v1032 = vadd.f32 %v1030, %v1031
    %v1033 = vsel %vm1029, %v983, 0.0
    %v1034 = vadd.f32 %v1032, %v1033
    %v1035 = vsel %vm1029, %v984, 0.0
    %v1036 = vadd.f32 %v1034, %v1035
    %v1037 = vsel %vm1029, %v985, 0.0
    %v1038 = vadd.f32 %v1036, %v1037
    %v1039 = vsel %vm1029, %v986, 0.0
    %v1040 = vadd.f32 %v1038, %v1039
    %v1041 = vsel %vm1029, %v987, 0.0
    %v1042 = vadd.f32 %v1040, %v1041
    %v1043 = vsel %vm1029, %v988, 0.0
    %v1044 = vadd.f32 %v1042, %v1043
    %v1045 = vsel %vm1029, %v989, 0.0
    %v1046 = vadd.f32 %v1044, %v1045
    %v1047 = vsel %vm1029, %v990, 0.0
    %v1048 = vadd.f32 %v1046, %v1047
    %v1049 = vsel %vm1029, %v991, 0.0
    %v1050 = vadd.f32 %v1048, %v1049
    %v1051 = vsel %vm1029, %v992, 0.0
    %v1052 = vadd.f32 %v1050, %v1051
    %v1053 = vsel %vm1029, %v993, 0.0
    %v1054 = vadd.f32 %v1052, %v1053
    %v1055 = vsel %vm1029, %v994, 0.0
    %v1056 = vadd.f32 %v1054, %v1055
    %v1057 = vsel %vm1029, %v995, 0.0
    %v1058 = vadd.f32 %v1056, %v1057
    %v1059 = vsel %vm1029, %v996, 0.0
    %v1060 = vadd.f32 %v1058, %v1059
    %v1061 = vrot.slane %v1060, 4
    %v1062 = vadd.f32 %v1060, %v1061
    %v1063 = vrot.slane %v1062, 2
    %v1064 = vadd.f32 %v1062, %v1063
    %v1065 = vrot.slane %v1064, 1
    %v1066 = vadd.f32 %v1064, %v1065
    %v1067 = vsel %vm1029, %v1013, 0.0
    %v1068 = vsel %vm1029, %v1014, 0.0
    %v1069 = vadd.f32 %v1067, %v1068
    %v1070 = vsel %vm1029, %v1015, 0.0
    %v1071 = vadd.f32 %v1069, %v1070
    %v1072 = vsel %vm1029, %v1016, 0.0
    %v1073 = vadd.f32 %v1071, %v1072
    %v1074 = vsel %vm1029, %v1017, 0.0
    %v1075 = vadd.f32 %v1073, %v1074
    %v1076 = vsel %vm1029, %v1018, 0.0
    %v1077 = vadd.f32 %v1075, %v1076
    %v1078 = vsel %vm1029, %v1019, 0.0
    %v1079 = vadd.f32 %v1077, %v1078
    %v1080 = vsel %vm1029, %v1020, 0.0
    %v1081 = vadd.f32 %v1079, %v1080
    %v1082 = vsel %vm1029, %v1021, 0.0
    %v1083 = vadd.f32 %v1081, %v1082
    %v1084 = vsel %vm1029, %v1022, 0.0
    %v1085 = vadd.f32 %v1083, %v1084
    %v1086 = vsel %vm1029, %v1023, 0.0
    %v1087 = vadd.f32 %v1085, %v1086
    %v1088 = vsel %vm1029, %v1024, 0.0
    %v1089 = vadd.f32 %v1087, %v1088
    %v1090 = vsel %vm1029, %v1025, 0.0
    %v1091 = vadd.f32 %v1089, %v1090
    %v1092 = vsel %vm1029, %v1026, 0.0
    %v1093 = vadd.f32 %v1091, %v1092
    %v1094 = vsel %vm1029, %v1027, 0.0
    %v1095 = vadd.f32 %v1093, %v1094
    %v1096 = vsel %vm1029, %v1028, 0.0
    %v1097 = vadd.f32 %v1095, %v1096
    %v1098 = vrot.slane %v1097, 4
    %v1099 = vadd.f32 %v1097, %v1098
    %v1100 = vrot.slane %v1099, 2
    %v1101 = vadd.f32 %v1099, %v1100
    %v1102 = vrot.slane %v1101, 1
    %v1103 = vadd.f32 %v1101, %v1102
    %vm1104 = vcmp.eq.s32.totalorder %v239, 0
    %vm1105 = vcmp.eq.s32.totalorder %v239, 1
    %1107 = vset.pattern.permute.xlu0 0
    %1108 = vperm.xlu0 %1107, %v1103
    %v1109 = vpop.permute.xlu0 %1108
    %v1111 = vsel %vm1105, %v1109, 0.0
    %1113 = vset.pattern.permute.xlu0 0
    %1114 = vperm.xlu0 %1113, %v1066
    %v1115 = vpop.permute.xlu0 %1114
    %v1117 = vsel %vm1104, %v1115, %v1111
    %1118 = vst [vmem:[#allocation2] sm:$0x1] %v1117
    // Predicated region
    $region22: #{tpu_custom_call.1} parent=1 // pred_check
      _
    $region23: #{tpu_custom_call.1} parent=1 // pred_check_branch
      %1120 = sbr.rel (0) target = $region25
    $region24: #{tpu_custom_call.1} parent=1 // pred_region
      %1122 = vsyncadd [#allocation3], 0
      %s1124 = sshll.u32 [#allocation2], 4
      %s1125 = int_to_ptr.vmem [resolvable:$true] %s1124
      %s1126 = sshll.u32 %s5, 4
      %s1127 = int_to_ptr.hbm [resolvable:$true] %s1126
      %1129 = dma.vmem_to_hbm [thread:$0]  %s1125, 16, %s1127, [#allocation3]
    $region25: #{tpu_custom_call.1} parent=1 // pred_fallthru
      _
    // Predicated region
    $region26: #{tpu_custom_call.1} parent=1 // pred_check
      _
    $region27: #{tpu_custom_call.1} parent=1 // pred_check_branch
      %1131 = sbr.rel (0) target = $region29
    $region28: #{tpu_custom_call.1} parent=1 // pred_region
      %1133 = dma.done [#allocation3], 16
    $region29: #{tpu_custom_call.1} parent=1 // pred_fallthru
      _
    %1134 = vsyncpa [#allocation3], 1

</llo_original>
